<compile_context>
chip_gen: v5e
topology: v5e:2x2
jax: 0.10.0
libtpu: 0.0.40
codegen_flags: <defaults>
</compile_context>

<pallas_src>
import jax
import jax.numpy as jnp
from jax import lax
from jax.experimental import pallas as pl
from jax.experimental.pallas import tpu as pltpu

# ----------------------------- configuration --------------------------------
N_NODES  = 16     # nodes in the rpi heterogeneous graph
F_IN     = 32     # HGNN input node-feature dim
RPI_SIZE = 32     # hidden_dim == rpi.get_output_size()
EMB_DIM  = 128    # emb_dim of sequence encoders
MAX_LEN  = 8      # max sequence length
VOCAB    = 16     # synthetic token vocabulary
BATCH    = 8      # number of (rna, protein) pairs
OUT_DIM  = 1      # output_dim
BN_EPS   = 1e-5
HID1     = 64     # KAN hidden width

_VMEM = pl.BlockSpec(memory_space=pltpu.MemorySpace.VMEM)


# ------------------------------ fused kernel ---------------------------------
def _het_rpi_kernel(adj_ref, x_ref, hw_ref, hb_ref,          # HGNN
                    fcw_ref, fcb_ref,                        # rpi_fc (BN folded)
                    idx_ref, tok_ref,                        # [rna|pro] stacked
                    emb_ref, whead_ref, brna_ref, bpro_ref,  # seq encoders
                    kw1r_ref, kw1s_ref, kb1_ref,             # KAN layer 1
                    kw2t_ref, kb2_ref,                       # KAN layer 2
                    o_ref):
    f32 = jnp.float32
    B, R, H = BATCH, RPI_SIZE, HID1

    # ---------------- HGNN: relu(A @ (X @ W) + b) ----------------
    xw = jnp.dot(x_ref[...], hw_ref[...], preferred_element_type=f32)
    rpi = jnp.dot(adj_ref[...], xw, preferred_element_type=f32)
    rpi = jnp.maximum(rpi + hb_ref[...], 0.0)

    # ---------------- rpi_fc: 3x (Linear[BN folded] -> ReLU) ------
    for l in range(3):  # static unroll, activation stays in vregs
        rpi = jnp.maximum(
            jnp.dot(rpi, fcw_ref[l], preferred_element_type=f32) + fcb_ref[l],
            0.0)

    # -------- node gathers: ONE stacked one-hot matmul (rna|pro) --
    node_iota = lax.broadcasted_iota(jnp.int32, (2 * B, N_NODES), 1)
    oh = (node_iota == idx_ref[...]).astype(f32)              # (2B, N_NODES)
    rpi_slab = jnp.dot(oh, rpi, preferred_element_type=f32)   # (2B, R) [rna; pro]

    # -------- seq encoders: stacked count-matrix pool + fused heads
    voc_iota = lax.broadcasted_iota(jnp.int32, (2 * B, MAX_LEN, VOCAB), 2)
    cnt = jnp.sum((tok_ref[...][:, :, None] == voc_iota).astype(f32),
                  axis=1)                                      # (2B, VOCAB)
    # emb_ref: (VOCAB, 3*EMB_DIM), 1/MAX_LEN pre-folded -> mean-pooled
    # features of the 3 encoders in one lane-dense 384-wide slab.
    pooled = jnp.dot(cnt, emb_ref[...], preferred_element_type=f32)  # (2B, 384)
    # whead_ref: (384, 2R) = [w_rna3 | w_pro3] * 1/3 -> one K=384 contraction
    seq_all = jnp.dot(pooled, whead_ref[...], preferred_element_type=f32)
    seq_rna = seq_all[:B, :R] + brna_ref[...]                  # (B, R)
    seq_pro = seq_all[B:, R:] + bpro_ref[...]                  # (B, R)
    seq_slab = jnp.concatenate([seq_rna, seq_pro], axis=0)     # (2B, R)

    # ------------- KAN decoder (base branch, concat-free) ----------
    # fea = [rna_rpi | seq_rna | pro_rpi | seq_pro]  (never materialized).
    # kw1r: (R, 2H) = [W1[0:R] | W1[2R:3R]], kw1s: (R, 2H) = [W1[R:2R] | W1[3R:4R]]
    rpi_part = jnp.dot(jax.nn.silu(rpi_slab), kw1r_ref[...],
                       preferred_element_type=f32)             # (2B, 2H)
    seq_part = jnp.dot(jax.nn.silu(seq_slab), kw1s_ref[...],
                       preferred_element_type=f32)             # (2B, 2H)
    h = (kb1_ref[...]
         + rpi_part[:B, :H] + rpi_part[B:, H:]
         + seq_part[:B, :H] + seq_part[B:, H:])                # (B, H)
    h = jax.nn.silu(h)
    # final (64 -> 1) projection on VPU + lane reduce (no N=1 MXU output)
    o_ref[...] = jnp.sum(h * kw2t_ref[...], axis=-1, keepdims=True) + kb2_ref[...]


# --------------------------- parameter construction --------------------------
def make_params(key):
    ks = jax.random.split(key, 24)
    i = iter(range(24))
    nk = lambda: ks[next(i)]

    # symmetric row-normalized adjacency for the rpi graph
    a = (jax.random.uniform(nk(), (N_NODES, N_NODES)) > 0.6).astype(jnp.float32)
    a = a + a.T + jnp.eye(N_NODES, dtype=jnp.float32)
    adj = a / jnp.sum(a, axis=1, keepdims=True)

    node_feat = jax.random.normal(nk(), (N_NODES, F_IN), jnp.float32) * 0.5
    hgnn_w = jax.random.normal(nk(), (F_IN, RPI_SIZE), jnp.float32) * (1.0 / F_IN ** 0.5)
    hgnn_b = jax.random.normal(nk(), (1, RPI_SIZE), jnp.float32) * 0.01

    rpi_fc = []
    for _ in range(3):
        w = jax.random.normal(nk(), (RPI_SIZE, RPI_SIZE), jnp.float32) * (1.0 / RPI_SIZE ** 0.5)
        b = jax.random.normal(nk(), (1, RPI_SIZE), jnp.float32) * 0.01
        gamma = jnp.ones((1, RPI_SIZE), jnp.float32)
        beta = jnp.zeros((1, RPI_SIZE), jnp.float32)
        mean = jax.random.normal(nk(), (1, RPI_SIZE), jnp.float32) * 0.05
        var = jnp.ones((1, RPI_SIZE), jnp.float32)
        rpi_fc.append((w, b, gamma, beta, mean, var))

    emb_tables = jnp.stack(
        [jax.random.normal(nk(), (VOCAB, EMB_DIM), jnp.float32) * 0.1 for _ in range(3)])
    w_rna = jax.random.normal(nk(), (3, EMB_DIM, RPI_SIZE), jnp.float32) * (1.0 / EMB_DIM ** 0.5)
    b_rna = jax.random.normal(nk(), (3, 1, RPI_SIZE), jnp.float32) * 0.01
    w_pro = jax.random.normal(nk(), (3, EMB_DIM, RPI_SIZE), jnp.float32) * (1.0 / EMB_DIM ** 0.5)
    b_pro = jax.random.normal(nk(), (3, 1, RPI_SIZE), jnp.float32) * 0.01

    fea_dim = RPI_SIZE * 2 * 2
    kan_w1 = jax.random.normal(nk(), (fea_dim, HID1), jnp.float32) * (1.0 / fea_dim ** 0.5)
    kan_b1 = jax.random.normal(nk(), (1, HID1), jnp.float32) * 0.01
    kan_w2 = jax.random.normal(nk(), (HID1, OUT_DIM), jnp.float32) * (1.0 / HID1 ** 0.5)
    kan_b2 = jax.random.normal(nk(), (1, OUT_DIM), jnp.float32) * 0.01

    return dict(adj=adj, node_feat=node_feat, hgnn_w=hgnn_w, hgnn_b=hgnn_b,
                rpi_fc=rpi_fc, emb_tables=emb_tables,
                w_rna=w_rna, b_rna=b_rna, w_pro=w_pro, b_pro=b_pro,
                kan_w1=kan_w1, kan_b1=kan_b1, kan_w2=kan_w2, kan_b2=kan_b2)


def fold_params(p):
    """One-time algebraic folding (done once, outside the hot path).

    * BatchNorm (eval) folded into the Linear weights/bias of rpi_fc.
    * Embedding tables concatenated to (VOCAB, 3*EMB_DIM) with 1/MAX_LEN
      pre-folded; per-encoder head weights for rna and pro packed side by
      side into one (3*EMB_DIM, 2*RPI_SIZE) matrix with 1/3 folded in.
    * KAN W1 re-packed into two (RPI_SIZE, 2*HID1) blocks so the rna and
      pro contributions of each chunk pair come out of one matmul.
    * KAN W2 transposed to (1, HID1) for the in-kernel lane reduction.
    """
    R, H = RPI_SIZE, HID1
    fcw, fcb = [], []
    for (w, b, gamma, beta, mean, var) in p['rpi_fc']:
        scale = gamma * jax.lax.rsqrt(var + BN_EPS)        # (1, R)
        fcw.append(w * scale)                              # broadcast over rows
        fcb.append((b - mean) * scale + beta)
    emb_concat = (jnp.transpose(p['emb_tables'], (1, 0, 2))
                  .reshape(VOCAB, 3 * EMB_DIM)) * (1.0 / MAX_LEN)
    w_heads = jnp.concatenate(
        [p['w_rna'].reshape(3 * EMB_DIM, R),
         p['w_pro'].reshape(3 * EMB_DIM, R)], axis=1) * (1.0 / 3.0)
    kw1 = p['kan_w1']   # (4R, H); fea = [rna_rpi | seq_rna | pro_rpi | seq_pro]
    kw1_rpi = jnp.concatenate([kw1[0 * R:1 * R], kw1[2 * R:3 * R]], axis=1)  # (R, 2H)
    kw1_seq = jnp.concatenate([kw1[1 * R:2 * R], kw1[3 * R:4 * R]], axis=1)  # (R, 2H)
    return dict(
        adj=p['adj'], node_feat=p['node_feat'],
        hgnn_w=p['hgnn_w'], hgnn_b=p['hgnn_b'],
        fc_w=jnp.stack(fcw), fc_b=jnp.stack(fcb),
        emb_concat=emb_concat, w_heads=w_heads,
        b_rna=jnp.mean(p['b_rna'], axis=0),
        b_pro=jnp.mean(p['b_pro'], axis=0),
        kw1_rpi=kw1_rpi, kw1_seq=kw1_seq, kan_b1=p['kan_b1'],
        kan_w2t=p['kan_w2'].T, kan_b2=p['kan_b2'])


# -------------------------------- forward ------------------------------------
def het_rpi_forward(fp, rna_tok, pro_tok, rna_idx, pro_idx):
    # data = (data[0]=(rna_tok, pro_tok), data[1]=rna_idx, data[2]=pro_idx)
    idx_all = jnp.concatenate(
        [rna_idx.reshape(BATCH, 1), pro_idx.reshape(BATCH, 1)],
        axis=0).astype(jnp.int32)                              # (2B, 1)
    tok_all = jnp.concatenate(
        [rna_tok, pro_tok], axis=0).astype(jnp.int32)          # (2B, MAX_LEN)
    return pl.pallas_call(
        _het_rpi_kernel,
        out_shape=jax.ShapeDtypeStruct((BATCH, OUT_DIM), jnp.float32),
        in_specs=[_VMEM] * 17,
        out_specs=_VMEM,
    )(fp['adj'], fp['node_feat'], fp['hgnn_w'], fp['hgnn_b'],
      fp['fc_w'], fp['fc_b'],
      idx_all, tok_all,
      fp['emb_concat'], fp['w_heads'], fp['b_rna'], fp['b_pro'],
      fp['kw1_rpi'], fp['kw1_seq'], fp['kan_b1'],
      fp['kan_w2t'], fp['kan_b2'])


# ------------------------- pure-JAX reference (unfolded) ----------------------
def reference_forward(p, rna_tok, pro_tok, rna_idx, pro_idx):
    rpi = jax.nn.relu(p['adj'] @ (p['node_feat'] @ p['hgnn_w']) + p['hgnn_b'])
    for (w, b, gamma, beta, mean, var) in p['rpi_fc']:
        y = rpi @ w + b
        y = gamma * (y - mean) * jax.lax.rsqrt(var + BN_EPS) + beta
        rpi = jax.nn.relu(y)                       # Dropout is identity in eval
    rna_rpi, pro_rpi = rpi[rna_idx], rpi[pro_idx]

    def enc(tok, i):
        pooled = p['emb_tables'][i][tok].mean(axis=1)          # (B, EMB_DIM)
        return pooled @ p['w_rna'][i] + p['b_rna'][i], \
               pooled @ p['w_pro'][i] + p['b_pro'][i]

    outs = [enc(t, i) for t, i in
            [(rna_tok, 0), (rna_tok, 1), (rna_tok, 2)]]
    seq_rna = sum(o[0] for o in outs) / 3.0
    outs_p = [enc(t, i) for t, i in
              [(pro_tok, 0), (pro_tok, 1), (pro_tok, 2)]]
    seq_pro = sum(o[1] for o in outs_p) / 3.0

    fea = jnp.concatenate([rna_rpi, seq_rna, pro_rpi, seq_pro], axis=-1)
    h = jax.nn.silu(fea) @ p['kan_w1'] + p['kan_b1']
    h = jax.nn.silu(h)
    return h @ p['kan_w2'] + p['kan_b2']


# --------------------------------- main ---------------------------------------
if __name__ == "__main__":
    key = jax.random.PRNGKey(0)
    kp, k1, k2, k3, k4 = jax.random.split(key, 5)

    params = make_params(kp)
    folded = fold_params(params)               # one-time, outside the hot path

    rna_tok = jax.random.randint(k1, (BATCH, MAX_LEN), 0, VOCAB)
    pro_tok = jax.random.randint(k2, (BATCH, MAX_LEN), 0, VOCAB)
    rna_idx = jax.random.randint(k3, (BATCH,), 0, N_NODES)
    pro_idx = jax.random.randint(k4, (BATCH,), 0, N_NODES)

    fwd = jax.jit(het_rpi_forward)
    out = fwd(folded, rna_tok, pro_tok, rna_idx, pro_idx)
    out = jax.block_until_ready(out)

    ref = reference_forward(params, rna_tok, pro_tok, rna_idx, pro_idx)

    assert out.shape == (BATCH, OUT_DIM), out.shape
    assert out.dtype == jnp.float32
    assert bool(jnp.all(jnp.isfinite(out)))
    assert bool(jnp.allclose(out, ref, atol=2e-2, rtol=2e-2))
    print("KERNEL_OK")
</pallas_src>

<mosaic_0001>
module attributes {stable_mosaic.version = 11 : i64} {
  func.func @_het_rpi_kernel(%arg0: memref<16x16xf32, #tpu.memory_space<vmem>>, %arg1: memref<16x32xf32, #tpu.memory_space<vmem>>, %arg2: memref<32x32xf32, #tpu.memory_space<vmem>>, %arg3: memref<1x32xf32, #tpu.memory_space<vmem>>, %arg4: memref<3x32x32xf32, #tpu.memory_space<vmem>>, %arg5: memref<3x1x32xf32, #tpu.memory_space<vmem>>, %arg6: memref<16x1xi32, #tpu.memory_space<vmem>>, %arg7: memref<16x8xi32, #tpu.memory_space<vmem>>, %arg8: memref<16x384xf32, #tpu.memory_space<vmem>>, %arg9: memref<384x64xf32, #tpu.memory_space<vmem>>, %arg10: memref<1x32xf32, #tpu.memory_space<vmem>>, %arg11: memref<1x32xf32, #tpu.memory_space<vmem>>, %arg12: memref<32x128xf32, #tpu.memory_space<vmem>>, %arg13: memref<32x128xf32, #tpu.memory_space<vmem>>, %arg14: memref<1x64xf32, #tpu.memory_space<vmem>>, %arg15: memref<1x64xf32, #tpu.memory_space<vmem>>, %arg16: memref<1x1xf32, #tpu.memory_space<vmem>>, %arg17: memref<8x1xf32, #tpu.memory_space<vmem>>) attributes {dimension_semantics = [], scalar_prefetch = 0 : i64, scratch_operands = 0 : i64, tpu.core_type = #tpu.core_type<tc>} {
    %c0 = arith.constant 0 : index
    %c0_0 = arith.constant 0 : index
    %0 = vector.load %arg1[%c0, %c0_0] : memref<16x32xf32, #tpu.memory_space<vmem>>, vector<16x32xf32>
    %c0_1 = arith.constant 0 : index
    %c0_2 = arith.constant 0 : index
    %1 = vector.load %arg2[%c0_1, %c0_2] : memref<32x32xf32, #tpu.memory_space<vmem>>, vector<32x32xf32>
    %cst = arith.constant dense<0.000000e+00> : vector<16x32xf32>
    %2 = tpu.matmul %0, %1, %cst {dimension_numbers = #tpu.dot_dimension_numbers<[1], [0], [0], [1], [0, 0, 1, 1], [], []>} : vector<16x32xf32>, vector<32x32xf32>, vector<16x32xf32> -> vector<16x32xf32>
    %c0_3 = arith.constant 0 : index
    %c0_4 = arith.constant 0 : index
    %3 = vector.load %arg0[%c0_3, %c0_4] : memref<16x16xf32, #tpu.memory_space<vmem>>, vector<16x16xf32>
    %cst_5 = arith.constant dense<0.000000e+00> : vector<16x32xf32>
    %4 = tpu.matmul %3, %2, %cst_5 {dimension_numbers = #tpu.dot_dimension_numbers<[1], [0], [0], [1], [0, 0, 1, 1], [], []>} : vector<16x16xf32>, vector<16x32xf32>, vector<16x32xf32> -> vector<16x32xf32>
    %c0_6 = arith.constant 0 : index
    %c0_7 = arith.constant 0 : index
    %5 = vector.load %arg3[%c0_6, %c0_7] : memref<1x32xf32, #tpu.memory_space<vmem>>, vector<1x32xf32>
    %6 = vector.broadcast %5 : vector<1x32xf32> to vector<16x32xf32>
    %7 = arith.addf %4, %6 : vector<16x32xf32>
    %cst_8 = arith.constant 0.000000e+00 : f32
    %8 = vector.broadcast %cst_8 : f32 to vector<16x32xf32>
    %9 = arith.maximumf %7, %8 : vector<16x32xf32>
    %c0_9 = arith.constant 0 : index
    %c0_10 = arith.constant 0 : index
    %c0_11 = arith.constant 0 : index
    %10 = vector.load %arg4[%c0_9, %c0_10, %c0_11] : memref<3x32x32xf32, #tpu.memory_space<vmem>>, vector<1x32x32xf32>
    %11 = vector.shape_cast %10 : vector<1x32x32xf32> to vector<32x32xf32>
    %cst_12 = arith.constant dense<0.000000e+00> : vector<16x32xf32>
    %12 = tpu.matmul %9, %11, %cst_12 {dimension_numbers = #tpu.dot_dimension_numbers<[1], [0], [0], [1], [0, 0, 1, 1], [], []>} : vector<16x32xf32>, vector<32x32xf32>, vector<16x32xf32> -> vector<16x32xf32>
    %c0_13 = arith.constant 0 : index
    %c0_14 = arith.constant 0 : index
    %c0_15 = arith.constant 0 : index
    %13 = vector.load %arg5[%c0_13, %c0_14, %c0_15] : memref<3x1x32xf32, #tpu.memory_space<vmem>>, vector<1x1x32xf32>
    %14 = vector.shape_cast %13 : vector<1x1x32xf32> to vector<1x32xf32>
    %15 = vector.broadcast %14 : vector<1x32xf32> to vector<16x32xf32>
    %16 = arith.addf %12, %15 : vector<16x32xf32>
    %cst_16 = arith.constant 0.000000e+00 : f32
    %17 = vector.broadcast %cst_16 : f32 to vector<16x32xf32>
    %18 = arith.maximumf %16, %17 : vector<16x32xf32>
    %c1 = arith.constant 1 : index
    %c0_17 = arith.constant 0 : index
    %c0_18 = arith.constant 0 : index
    %19 = vector.load %arg4[%c1, %c0_17, %c0_18] : memref<3x32x32xf32, #tpu.memory_space<vmem>>, vector<1x32x32xf32>
    %20 = vector.shape_cast %19 : vector<1x32x32xf32> to vector<32x32xf32>
    %cst_19 = arith.constant dense<0.000000e+00> : vector<16x32xf32>
    %21 = tpu.matmul %18, %20, %cst_19 {dimension_numbers = #tpu.dot_dimension_numbers<[1], [0], [0], [1], [0, 0, 1, 1], [], []>} : vector<16x32xf32>, vector<32x32xf32>, vector<16x32xf32> -> vector<16x32xf32>
    %c1_20 = arith.constant 1 : index
    %c0_21 = arith.constant 0 : index
    %c0_22 = arith.constant 0 : index
    %22 = vector.load %arg5[%c1_20, %c0_21, %c0_22] : memref<3x1x32xf32, #tpu.memory_space<vmem>>, vector<1x1x32xf32>
    %23 = vector.shape_cast %22 : vector<1x1x32xf32> to vector<1x32xf32>
    %24 = vector.broadcast %23 : vector<1x32xf32> to vector<16x32xf32>
    %25 = arith.addf %21, %24 : vector<16x32xf32>
    %cst_23 = arith.constant 0.000000e+00 : f32
    %26 = vector.broadcast %cst_23 : f32 to vector<16x32xf32>
    %27 = arith.maximumf %25, %26 : vector<16x32xf32>
    %c2 = arith.constant 2 : index
    %c0_24 = arith.constant 0 : index
    %c0_25 = arith.constant 0 : index
    %28 = vector.load %arg4[%c2, %c0_24, %c0_25] : memref<3x32x32xf32, #tpu.memory_space<vmem>>, vector<1x32x32xf32>
    %29 = vector.shape_cast %28 : vector<1x32x32xf32> to vector<32x32xf32>
    %cst_26 = arith.constant dense<0.000000e+00> : vector<16x32xf32>
    %30 = tpu.matmul %27, %29, %cst_26 {dimension_numbers = #tpu.dot_dimension_numbers<[1], [0], [0], [1], [0, 0, 1, 1], [], []>} : vector<16x32xf32>, vector<32x32xf32>, vector<16x32xf32> -> vector<16x32xf32>
    %c2_27 = arith.constant 2 : index
    %c0_28 = arith.constant 0 : index
    %c0_29 = arith.constant 0 : index
    %31 = vector.load %arg5[%c2_27, %c0_28, %c0_29] : memref<3x1x32xf32, #tpu.memory_space<vmem>>, vector<1x1x32xf32>
    %32 = vector.shape_cast %31 : vector<1x1x32xf32> to vector<1x32xf32>
    %33 = vector.broadcast %32 : vector<1x32xf32> to vector<16x32xf32>
    %34 = arith.addf %30, %33 : vector<16x32xf32>
    %cst_30 = arith.constant 0.000000e+00 : f32
    %35 = vector.broadcast %cst_30 : f32 to vector<16x32xf32>
    %36 = arith.maximumf %34, %35 : vector<16x32xf32>
    %37 = tpu.iota {dimensions = array<i32: 1>} : vector<16x16xi32>
    %c0_31 = arith.constant 0 : index
    %c0_32 = arith.constant 0 : index
    %38 = vector.load %arg6[%c0_31, %c0_32] : memref<16x1xi32, #tpu.memory_space<vmem>>, vector<16x1xi32>
    %39 = vector.broadcast %38 : vector<16x1xi32> to vector<16x16xi32>
    %40 = arith.cmpi eq, %37, %39 : vector<16x16xi32>
    %41 = arith.extui %40 : vector<16x16xi1> to vector<16x16xi32>
    %42 = arith.sitofp %41 : vector<16x16xi32> to vector<16x16xf32>
    %cst_33 = arith.constant dense<0.000000e+00> : vector<16x32xf32>
    %43 = tpu.matmul %42, %36, %cst_33 {dimension_numbers = #tpu.dot_dimension_numbers<[1], [0], [0], [1], [0, 0, 1, 1], [], []>} : vector<16x16xf32>, vector<16x32xf32>, vector<16x32xf32> -> vector<16x32xf32>
    %44 = tpu.iota {dimensions = array<i32: 2>} : vector<16x8x16xi32>
    %c0_34 = arith.constant 0 : index
    %c0_35 = arith.constant 0 : index
    %45 = vector.load %arg7[%c0_34, %c0_35] : memref<16x8xi32, #tpu.memory_space<vmem>>, vector<16x8xi32>
    %46 = vector.shape_cast %45 : vector<16x8xi32> to vector<16x8x1xi32>
    %47 = vector.broadcast %46 : vector<16x8x1xi32> to vector<16x8x16xi32>
    %48 = arith.cmpi eq, %47, %44 : vector<16x8x16xi32>
    %49 = arith.extui %48 : vector<16x8x16xi1> to vector<16x8x16xi32>
    %50 = arith.sitofp %49 : vector<16x8x16xi32> to vector<16x8x16xf32>
    %cst_36 = arith.constant dense<0.000000e+00> : vector<16x16xf32>
    %51 = vector.multi_reduction <add>, %50, %cst_36 [1] : vector<16x8x16xf32> to vector<16x16xf32>
    %c0_37 = arith.constant 0 : index
    %c0_38 = arith.constant 0 : index
    %52 = vector.load %arg8[%c0_37, %c0_38] : memref<16x384xf32, #tpu.memory_space<vmem>>, vector<16x384xf32>
    %cst_39 = arith.constant dense<0.000000e+00> : vector<16x384xf32>
    %53 = tpu.matmul %51, %52, %cst_39 {dimension_numbers = #tpu.dot_dimension_numbers<[1], [0], [0], [1], [0, 0, 1, 1], [], []>} : vector<16x16xf32>, vector<16x384xf32>, vector<16x384xf32> -> vector<16x384xf32>
    %c0_40 = arith.constant 0 : index
    %c0_41 = arith.constant 0 : index
    %54 = vector.load %arg9[%c0_40, %c0_41] : memref<384x64xf32, #tpu.memory_space<vmem>>, vector<384x64xf32>
    %cst_42 = arith.constant dense<0.000000e+00> : vector<16x64xf32>
    %55 = tpu.matmul %53, %54, %cst_42 {dimension_numbers = #tpu.dot_dimension_numbers<[1], [0], [0], [1], [0, 0, 1, 1], [], []>} : vector<16x384xf32>, vector<384x64xf32>, vector<16x64xf32> -> vector<16x64xf32>
    %56 = vector.extract_strided_slice %55 {offsets = [0, 0], sizes = [8, 32], strides = [1, 1]} : vector<16x64xf32> to vector<8x32xf32>
    %c0_43 = arith.constant 0 : index
    %c0_44 = arith.constant 0 : index
    %57 = vector.load %arg10[%c0_43, %c0_44] : memref<1x32xf32, #tpu.memory_space<vmem>>, vector<1x32xf32>
    %58 = vector.broadcast %57 : vector<1x32xf32> to vector<8x32xf32>
    %59 = arith.addf %56, %58 : vector<8x32xf32>
    %60 = vector.extract_strided_slice %55 {offsets = [8, 32], sizes = [8, 32], strides = [1, 1]} : vector<16x64xf32> to vector<8x32xf32>
    %c0_45 = arith.constant 0 : index
    %c0_46 = arith.constant 0 : index
    %61 = vector.load %arg11[%c0_45, %c0_46] : memref<1x32xf32, #tpu.memory_space<vmem>>, vector<1x32xf32>
    %62 = vector.broadcast %61 : vector<1x32xf32> to vector<8x32xf32>
    %63 = arith.addf %60, %62 : vector<8x32xf32>
    %64 = tpu.concatenate %59, %63 in 0 : vector<8x32xf32>, vector<8x32xf32> -> vector<16x32xf32>
    %65 = arith.negf %43 : vector<16x32xf32>
    %66 = math.exp %65 : vector<16x32xf32>
    %cst_47 = arith.constant 1.000000e+00 : f32
    %67 = vector.broadcast %cst_47 : f32 to vector<16x32xf32>
    %68 = arith.addf %67, %66 : vector<16x32xf32>
    %69 = arith.divf %67, %68 : vector<16x32xf32>
    %70 = arith.mulf %43, %69 : vector<16x32xf32>
    %c0_48 = arith.constant 0 : index
    %c0_49 = arith.constant 0 : index
    %71 = vector.load %arg12[%c0_48, %c0_49] : memref<32x128xf32, #tpu.memory_space<vmem>>, vector<32x128xf32>
    %cst_50 = arith.constant dense<0.000000e+00> : vector<16x128xf32>
    %72 = tpu.matmul %70, %71, %cst_50 {dimension_numbers = #tpu.dot_dimension_numbers<[1], [0], [0], [1], [0, 0, 1, 1], [], []>} : vector<16x32xf32>, vector<32x128xf32>, vector<16x128xf32> -> vector<16x128xf32>
    %73 = arith.negf %64 : vector<16x32xf32>
    %74 = math.exp %73 : vector<16x32xf32>
    %cst_51 = arith.constant 1.000000e+00 : f32
    %75 = vector.broadcast %cst_51 : f32 to vector<16x32xf32>
    %76 = arith.addf %75, %74 : vector<16x32xf32>
    %77 = arith.divf %75, %76 : vector<16x32xf32>
    %78 = arith.mulf %64, %77 : vector<16x32xf32>
    %c0_52 = arith.constant 0 : index
    %c0_53 = arith.constant 0 : index
    %79 = vector.load %arg13[%c0_52, %c0_53] : memref<32x128xf32, #tpu.memory_space<vmem>>, vector<32x128xf32>
    %cst_54 = arith.constant dense<0.000000e+00> : vector<16x128xf32>
    %80 = tpu.matmul %78, %79, %cst_54 {dimension_numbers = #tpu.dot_dimension_numbers<[1], [0], [0], [1], [0, 0, 1, 1], [], []>} : vector<16x32xf32>, vector<32x128xf32>, vector<16x128xf32> -> vector<16x128xf32>
    %c0_55 = arith.constant 0 : index
    %c0_56 = arith.constant 0 : index
    %81 = vector.load %arg14[%c0_55, %c0_56] : memref<1x64xf32, #tpu.memory_space<vmem>>, vector<1x64xf32>
    %82 = vector.extract_strided_slice %72 {offsets = [0, 0], sizes = [8, 64], strides = [1, 1]} : vector<16x128xf32> to vector<8x64xf32>
    %83 = vector.broadcast %81 : vector<1x64xf32> to vector<8x64xf32>
    %84 = arith.addf %83, %82 : vector<8x64xf32>
    %85 = vector.extract_strided_slice %72 {offsets = [8, 64], sizes = [8, 64], strides = [1, 1]} : vector<16x128xf32> to vector<8x64xf32>
    %86 = arith.addf %84, %85 : vector<8x64xf32>
    %87 = vector.extract_strided_slice %80 {offsets = [0, 0], sizes = [8, 64], strides = [1, 1]} : vector<16x128xf32> to vector<8x64xf32>
    %88 = arith.addf %86, %87 : vector<8x64xf32>
    %89 = vector.extract_strided_slice %80 {offsets = [8, 64], sizes = [8, 64], strides = [1, 1]} : vector<16x128xf32> to vector<8x64xf32>
    %90 = arith.addf %88, %89 : vector<8x64xf32>
    %91 = arith.negf %90 : vector<8x64xf32>
    %92 = math.exp %91 : vector<8x64xf32>
    %cst_57 = arith.constant 1.000000e+00 : f32
    %93 = vector.broadcast %cst_57 : f32 to vector<8x64xf32>
    %94 = arith.addf %93, %92 : vector<8x64xf32>
    %95 = arith.divf %93, %94 : vector<8x64xf32>
    %96 = arith.mulf %90, %95 : vector<8x64xf32>
    %c0_58 = arith.constant 0 : index
    %c0_59 = arith.constant 0 : index
    %97 = vector.load %arg15[%c0_58, %c0_59] : memref<1x64xf32, #tpu.memory_space<vmem>>, vector<1x64xf32>
    %98 = vector.broadcast %97 : vector<1x64xf32> to vector<8x64xf32>
    %99 = arith.mulf %96, %98 : vector<8x64xf32>
    %cst_60 = arith.constant dense<0.000000e+00> : vector<8xf32>
    %100 = vector.multi_reduction <add>, %99, %cst_60 [1] : vector<8x64xf32> to vector<8xf32>
    %101 = vector.shape_cast %100 : vector<8xf32> to vector<8x1xf32>
    %c0_61 = arith.constant 0 : index
    %c0_62 = arith.constant 0 : index
    %102 = vector.load %arg16[%c0_61, %c0_62] : memref<1x1xf32, #tpu.memory_space<vmem>>, vector<1x1xf32>
    %103 = vector.broadcast %102 : vector<1x1xf32> to vector<8x1xf32>
    %104 = arith.addf %101, %103 : vector<8x1xf32>
    %c0_63 = arith.constant 0 : index
    %c0_64 = arith.constant 0 : index
    %105 = vector.load %arg17[%c0_63, %c0_64] : memref<8x1xf32, #tpu.memory_space<vmem>>, vector<8x1xf32>
    tpu.vector_store %arg17[%c0_63, %c0_64], %104 {strides = array<i32>} : memref<8x1xf32, #tpu.memory_space<vmem>>, vector<8x1xf32>,
    return
  }
}

</mosaic_0001>

<llo_original>
// kernel: het_rpi_forward.1
$region0: #{het_rpi_forward.1}
  #allocation0 [shape = 'u32[]', space=smem, size = 0x4, offset = 0x4, fixed_abs, tag = 'smem constant byte address 0x4 - core index']
  #allocation1 [shape = 'u32[72,128]{1,0:T(1,128)}', space=vmem, size = 0x9000, scoped, tag = 'internal scratch']
  #allocation2 [shape = 'f32[1,1]{1,0:T(1,128)S(1)}', space=vmem, size = 0x200, scoped, tag = 'scoped memory for het_rpi_forward.1']
  %s0 = inlined_call_operand.vmem [shape: f32[16,16], index: 0, kind: input, shape index: {}]
  %s1 = inlined_call_operand.vmem [shape: f32[16,32], index: 1, kind: input, shape index: {}]
  %s2 = inlined_call_operand.vmem [shape: f32[32,32], index: 2, kind: input, shape index: {}]
  %s3 = inlined_call_operand.vmem [shape: f32[1,32], index: 3, kind: input, shape index: {}]
  %s4 = inlined_call_operand.vmem [shape: f32[3,32,32], index: 4, kind: input, shape index: {}]
  %s5 = inlined_call_operand.vmem [shape: f32[3,1,32], index: 5, kind: input, shape index: {}]
  %s6 = inlined_call_operand.vmem [shape: s32[16,1], index: 6, kind: input, shape index: {}]
  %s7 = inlined_call_operand.vmem [shape: s32[16,8], index: 7, kind: input, shape index: {}]
  %s8 = inlined_call_operand.vmem [shape: f32[16,384], index: 8, kind: input, shape index: {}]
  %s9 = inlined_call_operand.vmem [shape: f32[384,64], index: 9, kind: input, shape index: {}]
  %s10 = inlined_call_operand.vmem [shape: f32[1,32], index: 10, kind: input, shape index: {}]
  %s11 = inlined_call_operand.vmem [shape: f32[1,32], index: 11, kind: input, shape index: {}]
  %s12 = inlined_call_operand.vmem [shape: f32[32,128], index: 12, kind: input, shape index: {}]
  %s13 = inlined_call_operand.vmem [shape: f32[32,128], index: 13, kind: input, shape index: {}]
  %s14 = inlined_call_operand.vmem [shape: f32[1,64], index: 14, kind: input, shape index: {}]
  %s15 = inlined_call_operand.vmem [shape: f32[1,64], index: 15, kind: input, shape index: {}]
  %s16 = inlined_call_operand.<no memory space> [shape: f32[1,1], index: 16, kind: input, shape index: {}]
  %s17 = inlined_call_operand.vmem [shape: f32[8,1], index: 17, kind: output, shape index: {}]
  %s18 = sld [smem:[#allocation0]]
  $region78: #{het_rpi_forward.1} parent=0
    _
  %s20 = ssub.s32 1, %s18
  %s21 = scalar_select 0, %s20, %s18
  %v22 = vstv %s16
  %23 = vst [vmem:[#allocation2] sm:$0x1] %v22
  // Predicated region
  $region2: #{het_rpi_forward.1} parent=0 // pred_check
    _
  $region3: #{het_rpi_forward.1} parent=0 // pred_check_branch
    %25 = sbr.rel (0) target = $region5
  $region4: #{het_rpi_forward.1} parent=0 // pred_region
    _
  $region5: #{het_rpi_forward.1} parent=0 // pred_fallthru
    _
  // Predicated region
  $region6: #{het_rpi_forward.1} parent=0 // pred_check
    _
  $region7: #{het_rpi_forward.1} parent=0 // pred_check_branch
    %27 = sbr.rel (0) target = $region9
  $region8: #{het_rpi_forward.1} parent=0 // pred_region
    _
  $region9: #{het_rpi_forward.1} parent=0 // pred_fallthru
    _
  // Predicated region
  $region10: #{het_rpi_forward.1} parent=0 // pred_check
    _
  $region11: #{het_rpi_forward.1} parent=0 // pred_check_branch
    %29 = sbr.rel (0) target = $region13
  $region12: #{het_rpi_forward.1} parent=0 // pred_region
    _
  $region13: #{het_rpi_forward.1} parent=0 // pred_fallthru
    _
  // Predicated region
  $region14: #{het_rpi_forward.1} parent=0 // pred_check
    _
  $region15: #{het_rpi_forward.1} parent=0 // pred_check_branch
    %31 = sbr.rel (0) target = $region17
  $region16: #{het_rpi_forward.1} parent=0 // pred_region
    _
  $region17: #{het_rpi_forward.1} parent=0 // pred_fallthru
    _
  // Predicated region
  $region18: #{het_rpi_forward.1} parent=0 // pred_check
    _
  $region19: #{het_rpi_forward.1} parent=0 // pred_check_branch
    %33 = sbr.rel (0) target = $region21
  $region20: #{het_rpi_forward.1} parent=0 // pred_region
    _
  $region21: #{het_rpi_forward.1} parent=0 // pred_fallthru
    _
  // Predicated region
  $region22: #{het_rpi_forward.1} parent=0 // pred_check
    _
  $region23: #{het_rpi_forward.1} parent=0 // pred_check_branch
    %35 = sbr.rel (0) target = $region25
  $region24: #{het_rpi_forward.1} parent=0 // pred_region
    _
  $region25: #{het_rpi_forward.1} parent=0 // pred_fallthru
    _
  // Predicated region
  $region26: #{het_rpi_forward.1} parent=0 // pred_check
    _
  $region27: #{het_rpi_forward.1} parent=0 // pred_check_branch
    %37 = sbr.rel (0) target = $region29
  $region28: #{het_rpi_forward.1} parent=0 // pred_region
    _
  $region29: #{het_rpi_forward.1} parent=0 // pred_fallthru
    _
  // Predicated region
  $region30: #{het_rpi_forward.1} parent=0 // pred_check
    _
  $region31: #{het_rpi_forward.1} parent=0 // pred_check_branch
    %39 = sbr.rel (0) target = $region33
  $region32: #{het_rpi_forward.1} parent=0 // pred_region
    _
  $region33: #{het_rpi_forward.1} parent=0 // pred_fallthru
    _
  // Predicated region
  $region34: #{het_rpi_forward.1} parent=0 // pred_check
    _
  $region35: #{het_rpi_forward.1} parent=0 // pred_check_branch
    %41 = sbr.rel (0) target = $region37
  $region36: #{het_rpi_forward.1} parent=0 // pred_region
    _
  $region37: #{het_rpi_forward.1} parent=0 // pred_fallthru
    _
  // Predicated region
  $region38: #{het_rpi_forward.1} parent=0 // pred_check
    _
  $region39: #{het_rpi_forward.1} parent=0 // pred_check_branch
    %43 = sbr.rel (0) target = $region41
  $region40: #{het_rpi_forward.1} parent=0 // pred_region
    _
  $region41: #{het_rpi_forward.1} parent=0 // pred_fallthru
    _
  // Predicated region
  $region42: #{het_rpi_forward.1} parent=0 // pred_check
    _
  $region43: #{het_rpi_forward.1} parent=0 // pred_check_branch
    %45 = sbr.rel (0) target = $region45
  $region44: #{het_rpi_forward.1} parent=0 // pred_region
    _
  $region45: #{het_rpi_forward.1} parent=0 // pred_fallthru
    _
  // Predicated region
  $region46: #{het_rpi_forward.1} parent=0 // pred_check
    _
  $region47: #{het_rpi_forward.1} parent=0 // pred_check_branch
    %47 = sbr.rel (0) target = $region49
  $region48: #{het_rpi_forward.1} parent=0 // pred_region
    _
  $region49: #{het_rpi_forward.1} parent=0 // pred_fallthru
    _
  // Predicated region
  $region50: #{het_rpi_forward.1} parent=0 // pred_check
    _
  $region51: #{het_rpi_forward.1} parent=0 // pred_check_branch
    %49 = sbr.rel (0) target = $region53
  $region52: #{het_rpi_forward.1} parent=0 // pred_region
    _
  $region53: #{het_rpi_forward.1} parent=0 // pred_fallthru
    _
  // Predicated region
  $region54: #{het_rpi_forward.1} parent=0 // pred_check
    _
  $region55: #{het_rpi_forward.1} parent=0 // pred_check_branch
    %51 = sbr.rel (0) target = $region57
  $region56: #{het_rpi_forward.1} parent=0 // pred_region
    _
  $region57: #{het_rpi_forward.1} parent=0 // pred_fallthru
    _
  // Predicated region
  $region58: #{het_rpi_forward.1} parent=0 // pred_check
    _
  $region59: #{het_rpi_forward.1} parent=0 // pred_check_branch
    %53 = sbr.rel (0) target = $region61
  $region60: #{het_rpi_forward.1} parent=0 // pred_region
    _
  $region61: #{het_rpi_forward.1} parent=0 // pred_fallthru
    _
  // Predicated region
  $region62: #{het_rpi_forward.1} parent=0 // pred_check
    _
  $region63: #{het_rpi_forward.1} parent=0 // pred_check_branch
    %55 = sbr.rel (0) target = $region65
  $region64: #{het_rpi_forward.1} parent=0 // pred_region
    _
  $region65: #{het_rpi_forward.1} parent=0 // pred_fallthru
    _
  // Predicated region
  $region66: #{het_rpi_forward.1} parent=0 // pred_check
    _
  $region67: #{het_rpi_forward.1} parent=0 // pred_check_branch
    %57 = sbr.rel (0) target = $region69
  $region68: #{het_rpi_forward.1} parent=0 // pred_region
    _
  $region69: #{het_rpi_forward.1} parent=0 // pred_fallthru
    _
  %v58 = vld [vmem:[%s1] sm:$0xff]
  %v59 = vld [vmem:[%s1 + $0x8] sm:$0xff]
  %v60 = vld [vmem:[%s2] sm:$0xff]
  %v61 = vld [vmem:[%s2 + $0x8] sm:$0xff]
  %v62 = vld [vmem:[%s2 + $0x10] sm:$0xff]
  %v63 = vld [vmem:[%s2 + $0x18] sm:$0xff]
  %vm64 = vcmask 261120
  %v66 = vsel %vm64, %v58, 0
  %v69 = vsel %vm64, %v59, 0
  %71 = vmatpush.msra.mxu0 0.0
  %72 = vmatpush.msra.mxu0 0.0
  %73 = vmatpush.msra.mxu0 0.0
  %74 = vmatpush.msra.mxu0 0.0
  %75 = vmatpush.msra.mxu0 0.0
  %76 = vmatpush.msra.mxu0 0.0
  %77 = vmatpush.msra.mxu0 0.0
  %78 = vmatpush.msra.mxu0 0.0
  %79 = vmatpush.msra.mxu0 0.0
  %80 = vmatpush.msra.mxu0 0.0
  %81 = vmatpush.msra.mxu0 0.0
  %82 = vmatpush.msra.mxu0 0.0
  %83 = vmatpush.msra.mxu0 %v63
  %84 = vmatpush.msra.mxu0 %v62
  %85 = vmatpush.msra.mxu0 %v61
  %86 = vmatpush.msra.mxu0 %v60
  %87 = vmatmul.f32.gmra.mxu0 %v66
  %v88 = vpop.f32.mrf.mxu0
  %v89 = vadd.f32 0.0, %v88
  %90 = vmatmul.f32.gmra.mxu0 %v69
  %v91 = vpop.f32.mrf.mxu0
  %v92 = vadd.f32 0.0, %v91
  %93 = vdwg.mxu0
  %v94 = vld [vmem:[%s0] sm:$0xff]
  %v95 = vld [vmem:[%s0 + $0x8] sm:$0xff]
  %v96 = vld [vmem:[%s3] sm:$0x1]
  %v98 = vperm.slane %v96, 0
  %vm100 = vcmask 130048
  %v102 = vsel %vm100, %v94, 0
  %v105 = vsel %vm100, %v95, 0
  %107 = vmatpush.msra.mxu0 0.0
  %108 = vmatpush.msra.mxu0 0.0
  %109 = vmatpush.msra.mxu0 0.0
  %110 = vmatpush.msra.mxu0 0.0
  %111 = vmatpush.msra.mxu0 0.0
  %112 = vmatpush.msra.mxu0 0.0
  %113 = vmatpush.msra.mxu0 0.0
  %114 = vmatpush.msra.mxu0 0.0
  %115 = vmatpush.msra.mxu0 0.0
  %116 = vmatpush.msra.mxu0 0.0
  %117 = vmatpush.msra.mxu0 0.0
  %118 = vmatpush.msra.mxu0 0.0
  %119 = vmatpush.msra.mxu0 0.0
  %120 = vmatpush.msra.mxu0 0.0
  %121 = vmatpush.msra.mxu0 %v92
  %122 = vmatpush.msra.mxu0 %v89
  %123 = vmatmul.f32.gmra.mxu0 %v102
  %v124 = vpop.f32.mrf.mxu0
  %v125 = vadd.f32 %v98, %v124
  %126 = vmatmul.f32.gmra.mxu0 %v105
  %v127 = vpop.f32.mrf.mxu0
  %v128 = vadd.f32 %v98, %v127
  %129 = vdwg.mxu0
  %v130 = vmax.f32 %v125, 0.0
  %v131 = vmax.f32 %v128, 0.0
  %v132 = vld [vmem:[%s4] sm:$0xff]
  %v133 = vld [vmem:[%s4 + $0x8] sm:$0xff]
  %v134 = vld [vmem:[%s4 + $0x10] sm:$0xff]
  %v135 = vld [vmem:[%s4 + $0x18] sm:$0xff]
  %v136 = vld [vmem:[%s5] sm:$0x1]
  %v138 = vperm.slane %v136, 0
  %v141 = vsel %vm64, %v130, 0
  %v144 = vsel %vm64, %v131, 0
  %146 = vmatpush.msra.mxu0 0.0
  %147 = vmatpush.msra.mxu0 0.0
  %148 = vmatpush.msra.mxu0 0.0
  %149 = vmatpush.msra.mxu0 0.0
  %150 = vmatpush.msra.mxu0 0.0
  %151 = vmatpush.msra.mxu0 0.0
  %152 = vmatpush.msra.mxu0 0.0
  %153 = vmatpush.msra.mxu0 0.0
  %154 = vmatpush.msra.mxu0 0.0
  %155 = vmatpush.msra.mxu0 0.0
  %156 = vmatpush.msra.mxu0 0.0
  %157 = vmatpush.msra.mxu0 0.0
  %158 = vmatpush.msra.mxu0 %v135
  %159 = vmatpush.msra.mxu0 %v134
  %160 = vmatpush.msra.mxu0 %v133
  %161 = vmatpush.msra.mxu0 %v132
  %162 = vmatmul.f32.gmra.mxu0 %v141
  %v163 = vpop.f32.mrf.mxu0
  %v164 = vadd.f32 %v138, %v163
  %165 = vmatmul.f32.gmra.mxu0 %v144
  %v166 = vpop.f32.mrf.mxu0
  %v167 = vadd.f32 %v138, %v166
  %168 = vdwg.mxu0
  %v169 = vmax.f32 %v164, 0.0
  %v170 = vmax.f32 %v167, 0.0
  %s171 = scalar_lea.vmem %s4, 32
  %v172 = vld [vmem:[%s171] sm:$0xff]
  %v173 = vld [vmem:[%s171 + $0x8] sm:$0xff]
  %v174 = vld [vmem:[%s171 + $0x10] sm:$0xff]
  %v175 = vld [vmem:[%s171 + $0x18] sm:$0xff]
  %s176 = scalar_lea.vmem %s5, 1
  %v177 = vld [vmem:[%s176] sm:$0x1]
  %v179 = vperm.slane %v177, 0
  %v182 = vsel %vm64, %v169, 0
  %v185 = vsel %vm64, %v170, 0
  %187 = vmatpush.msra.mxu0 0.0
  %188 = vmatpush.msra.mxu0 0.0
  %189 = vmatpush.msra.mxu0 0.0
  %190 = vmatpush.msra.mxu0 0.0
  %191 = vmatpush.msra.mxu0 0.0
  %192 = vmatpush.msra.mxu0 0.0
  %193 = vmatpush.msra.mxu0 0.0
  %194 = vmatpush.msra.mxu0 0.0
  %195 = vmatpush.msra.mxu0 0.0
  %196 = vmatpush.msra.mxu0 0.0
  %197 = vmatpush.msra.mxu0 0.0
  %198 = vmatpush.msra.mxu0 0.0
  %199 = vmatpush.msra.mxu0 %v175
  %200 = vmatpush.msra.mxu0 %v174
  %201 = vmatpush.msra.mxu0 %v173
  %202 = vmatpush.msra.mxu0 %v172
  %203 = vmatmul.f32.gmra.mxu0 %v182
  %v204 = vpop.f32.mrf.mxu0
  %v205 = vadd.f32 %v179, %v204
  %206 = vmatmul.f32.gmra.mxu0 %v185
  %v207 = vpop.f32.mrf.mxu0
  %v208 = vadd.f32 %v179, %v207
  %209 = vdwg.mxu0
  %v210 = vmax.f32 %v205, 0.0
  %v211 = vmax.f32 %v208, 0.0
  %s212 = scalar_lea.vmem %s4, 64
  %v213 = vld [vmem:[%s212] sm:$0xff]
  %v214 = vld [vmem:[%s212 + $0x8] sm:$0xff]
  %v215 = vld [vmem:[%s212 + $0x10] sm:$0xff]
  %v216 = vld [vmem:[%s212 + $0x18] sm:$0xff]
  %s217 = scalar_lea.vmem %s5, 2
  %v218 = vld [vmem:[%s217] sm:$0x1]
  %v220 = vperm.slane %v218, 0
  %v223 = vsel %vm64, %v210, 0
  %v226 = vsel %vm64, %v211, 0
  %228 = vmatpush.msra.mxu0 0.0
  %229 = vmatpush.msra.mxu0 0.0
  %230 = vmatpush.msra.mxu0 0.0
  %231 = vmatpush.msra.mxu0 0.0
  %232 = vmatpush.msra.mxu0 0.0
  %233 = vmatpush.msra.mxu0 0.0
  %234 = vmatpush.msra.mxu0 0.0
  %235 = vmatpush.msra.mxu0 0.0
  %236 = vmatpush.msra.mxu0 0.0
  %237 = vmatpush.msra.mxu0 0.0
  %238 = vmatpush.msra.mxu0 0.0
  %239 = vmatpush.msra.mxu0 0.0
  %240 = vmatpush.msra.mxu0 %v216
  %241 = vmatpush.msra.mxu0 %v215
  %242 = vmatpush.msra.mxu0 %v214
  %243 = vmatpush.msra.mxu0 %v213
  %244 = vmatmul.f32.gmra.mxu0 %v223
  %v245 = vpop.f32.mrf.mxu0
  %v246 = vadd.f32 %v220, %v245
  %247 = vmatmul.f32.gmra.mxu0 %v226
  %v248 = vpop.f32.mrf.mxu0
  %v249 = vadd.f32 %v220, %v248
  %250 = vdwg.mxu0
  %v251 = vmax.f32 %v246, 0.0
  %v252 = vmax.f32 %v249, 0.0
  %v253 = vlaneseq
  %v254 = vand.u32 %v253, 127
  %v255 = vld [vmem:[%s6] sm:$0xff]
  %v256 = vld [vmem:[%s6 + $0x8] sm:$0xff]
  %257 = vset.pattern.permute.xlu0 0
  %258 = vperm.xlu0 %257, %v255
  %v259 = vpop.permute.xlu0 %258
  %260 = vset.pattern.permute.xlu0 0
  %261 = vperm.xlu0 %260, %v256
  %v262 = vpop.permute.xlu0 %261
  %vm263 = vcmp.eq.s32.totalorder %v254, %v259
  %vm264 = vcmp.eq.s32.totalorder %v254, %v262
  %v265 = vsel %vm263, 1, 0
  %v266 = vsel %vm264, 1, 0
  %v267 = vcvt.s32.f32 %v265
  %v268 = vcvt.s32.f32 %v266
  %v270 = vsel %vm100, %v267, 0
  %v273 = vsel %vm100, %v268, 0
  %275 = vmatpush.msra.mxu0 0.0
  %276 = vmatpush.msra.mxu0 0.0
  %277 = vmatpush.msra.mxu0 0.0
  %278 = vmatpush.msra.mxu0 0.0
  %279 = vmatpush.msra.mxu0 0.0
  %280 = vmatpush.msra.mxu0 0.0
  %281 = vmatpush.msra.mxu0 0.0
  %282 = vmatpush.msra.mxu0 0.0
  %283 = vmatpush.msra.mxu0 0.0
  %284 = vmatpush.msra.mxu0 0.0
  %285 = vmatpush.msra.mxu0 0.0
  %286 = vmatpush.msra.mxu0 0.0
  %287 = vmatpush.msra.mxu0 0.0
  %288 = vmatpush.msra.mxu0 0.0
  %289 = vmatpush.msra.mxu0 %v252
  %290 = vmatpush.msra.mxu0 %v251
  %291 = vmatmul.f32.gmra.mxu0 %v270
  %v292 = vpop.f32.mrf.mxu0
  %v293 = vadd.f32 0.0, %v292
  %294 = vmatmul.f32.gmra.mxu0 %v273
  %v295 = vpop.f32.mrf.mxu0
  %v296 = vadd.f32 0.0, %v295
  %297 = vdwg.mxu0
  %v298 = vld [vmem:[%s7] sm:$0xff]
  %v299 = vld [vmem:[%s7 + $0x8] sm:$0xff]
  %v300 = vperm.slane %v298, 0
  %v301 = vlaneseq
  %v302 = vshrl.u32 %v301, 7
  %304 = vset.pattern.permute.xlu0 %v302
  %305 = vperm.xlu0 %304, %v300
  %v306 = vpop.permute.xlu0 %305
  %v307 = vperm.slane %v298, 1
  %v308 = vlaneseq
  %v309 = vshrl.u32 %v308, 7
  %311 = vset.pattern.permute.xlu0 %v309
  %312 = vperm.xlu0 %311, %v307
  %v313 = vpop.permute.xlu0 %312
  %v314 = vperm.slane %v298, 2
  %v315 = vlaneseq
  %v316 = vshrl.u32 %v315, 7
  %318 = vset.pattern.permute.xlu0 %v316
  %319 = vperm.xlu0 %318, %v314
  %v320 = vpop.permute.xlu0 %319
  %v321 = vperm.slane %v298, 3
  %v322 = vlaneseq
  %v323 = vshrl.u32 %v322, 7
  %325 = vset.pattern.permute.xlu0 %v323
  %326 = vperm.xlu0 %325, %v321
  %v327 = vpop.permute.xlu0 %326
  %v328 = vperm.slane %v298, 4
  %v329 = vlaneseq
  %v330 = vshrl.u32 %v329, 7
  %332 = vset.pattern.permute.xlu0 %v330
  %333 = vperm.xlu0 %332, %v328
  %v334 = vpop.permute.xlu0 %333
  %v335 = vperm.slane %v298, 5
  %v336 = vlaneseq
  %v337 = vshrl.u32 %v336, 7
  %339 = vset.pattern.permute.xlu0 %v337
  %340 = vperm.xlu0 %339, %v335
  %v341 = vpop.permute.xlu0 %340
  %v342 = vperm.slane %v298, 6
  %v343 = vlaneseq
  %v344 = vshrl.u32 %v343, 7
  %346 = vset.pattern.permute.xlu0 %v344
  %347 = vperm.xlu0 %346, %v342
  %v348 = vpop.permute.xlu0 %347
  %v349 = vperm.slane %v298, 7
  %v350 = vlaneseq
  %v351 = vshrl.u32 %v350, 7
  %353 = vset.pattern.permute.xlu0 %v351
  %354 = vperm.xlu0 %353, %v349
  %v355 = vpop.permute.xlu0 %354
  %v356 = vperm.slane %v299, 0
  %v357 = vlaneseq
  %v358 = vshrl.u32 %v357, 7
  %360 = vset.pattern.permute.xlu0 %v358
  %361 = vperm.xlu0 %360, %v356
  %v362 = vpop.permute.xlu0 %361
  %v363 = vperm.slane %v299, 1
  %v364 = vlaneseq
  %v365 = vshrl.u32 %v364, 7
  %367 = vset.pattern.permute.xlu0 %v365
  %368 = vperm.xlu0 %367, %v363
  %v369 = vpop.permute.xlu0 %368
  %v370 = vperm.slane %v299, 2
  %v371 = vlaneseq
  %v372 = vshrl.u32 %v371, 7
  %374 = vset.pattern.permute.xlu0 %v372
  %375 = vperm.xlu0 %374, %v370
  %v376 = vpop.permute.xlu0 %375
  %v377 = vperm.slane %v299, 3
  %v378 = vlaneseq
  %v379 = vshrl.u32 %v378, 7
  %381 = vset.pattern.permute.xlu0 %v379
  %382 = vperm.xlu0 %381, %v377
  %v383 = vpop.permute.xlu0 %382
  %v384 = vperm.slane %v299, 4
  %v385 = vlaneseq
  %v386 = vshrl.u32 %v385, 7
  %388 = vset.pattern.permute.xlu0 %v386
  %389 = vperm.xlu0 %388, %v384
  %v390 = vpop.permute.xlu0 %389
  %v391 = vperm.slane %v299, 5
  %v392 = vlaneseq
  %v393 = vshrl.u32 %v392, 7
  %395 = vset.pattern.permute.xlu0 %v393
  %396 = vperm.xlu0 %395, %v391
  %v397 = vpop.permute.xlu0 %396
  %v398 = vperm.slane %v299, 6
  %v399 = vlaneseq
  %v400 = vshrl.u32 %v399, 7
  %402 = vset.pattern.permute.xlu0 %v400
  %403 = vperm.xlu0 %402, %v398
  %v404 = vpop.permute.xlu0 %403
  %v405 = vperm.slane %v299, 7
  %v406 = vlaneseq
  %v407 = vshrl.u32 %v406, 7
  %409 = vset.pattern.permute.xlu0 %v407
  %410 = vperm.xlu0 %409, %v405
  %v411 = vpop.permute.xlu0 %410
  %vm412 = vcmp.eq.s32.totalorder %v306, %v254
  %vm413 = vcmp.eq.s32.totalorder %v313, %v254
  %vm414 = vcmp.eq.s32.totalorder %v320, %v254
  %vm415 = vcmp.eq.s32.totalorder %v327, %v254
  %vm416 = vcmp.eq.s32.totalorder %v334, %v254
  %vm417 = vcmp.eq.s32.totalorder %v341, %v254
  %vm418 = vcmp.eq.s32.totalorder %v348, %v254
  %vm419 = vcmp.eq.s32.totalorder %v355, %v254
  %vm420 = vcmp.eq.s32.totalorder %v362, %v254
  %vm421 = vcmp.eq.s32.totalorder %v369, %v254
  %vm422 = vcmp.eq.s32.totalorder %v376, %v254
  %vm423 = vcmp.eq.s32.totalorder %v383, %v254
  %vm424 = vcmp.eq.s32.totalorder %v390, %v254
  %vm425 = vcmp.eq.s32.totalorder %v397, %v254
  %vm426 = vcmp.eq.s32.totalorder %v404, %v254
  %vm427 = vcmp.eq.s32.totalorder %v411, %v254
  %v428 = vsel %vm412, 1, 0
  %v429 = vsel %vm413, 1, 0
  %v430 = vsel %vm414, 1, 0
  %v431 = vsel %vm415, 1, 0
  %v432 = vsel %vm416, 1, 0
  %v433 = vsel %vm417, 1, 0
  %v434 = vsel %vm418, 1, 0
  %v435 = vsel %vm419, 1, 0
  %v436 = vsel %vm420, 1, 0
  %v437 = vsel %vm421, 1, 0
  %v438 = vsel %vm422, 1, 0
  %v439 = vsel %vm423, 1, 0
  %v440 = vsel %vm424, 1, 0
  %v441 = vsel %vm425, 1, 0
  %v442 = vsel %vm426, 1, 0
  %v443 = vsel %vm427, 1, 0
  %v444 = vcvt.s32.f32 %v428
  %v445 = vcvt.s32.f32 %v429
  %v446 = vcvt.s32.f32 %v430
  %v447 = vcvt.s32.f32 %v431
  %v448 = vcvt.s32.f32 %v432
  %v449 = vcvt.s32.f32 %v433
  %v450 = vcvt.s32.f32 %v434
  %v451 = vcvt.s32.f32 %v435
  %v452 = vcvt.s32.f32 %v436
  %v453 = vcvt.s32.f32 %v437
  %v454 = vcvt.s32.f32 %v438
  %v455 = vcvt.s32.f32 %v439
  %v456 = vcvt.s32.f32 %v440
  %v457 = vcvt.s32.f32 %v441
  %v458 = vcvt.s32.f32 %v442
  %v459 = vcvt.s32.f32 %v443
  %v460 = vsel %vm100, %v444, 0.0
  %v461 = vrot.slane %v460, 4
  %v462 = vadd.f32 %v460, %v461
  %v463 = vrot.slane %v462, 2
  %v464 = vadd.f32 %v462, %v463
  %v465 = vrot.slane %v464, 1
  %v466 = vadd.f32 %v464, %v465
  %v467 = vsel %vm100, %v445, 0.0
  %v468 = vrot.slane %v467, 4
  %v469 = vadd.f32 %v467, %v468
  %v470 = vrot.slane %v469, 2
  %v471 = vadd.f32 %v469, %v470
  %v472 = vrot.slane %v471, 1
  %v473 = vadd.f32 %v471, %v472
  %v474 = vsel %vm100, %v446, 0.0
  %v475 = vrot.slane %v474, 4
  %v476 = vadd.f32 %v474, %v475
  %v477 = vrot.slane %v476, 2
  %v478 = vadd.f32 %v476, %v477
  %v479 = vrot.slane %v478, 1
  %v480 = vadd.f32 %v478, %v479
  %v481 = vsel %vm100, %v447, 0.0
  %v482 = vrot.slane %v481, 4
  %v483 = vadd.f32 %v481, %v482
  %v484 = vrot.slane %v483, 2
  %v485 = vadd.f32 %v483, %v484
  %v486 = vrot.slane %v485, 1
  %v487 = vadd.f32 %v485, %v486
  %v488 = vsel %vm100, %v448, 0.0
  %v489 = vrot.slane %v488, 4
  %v490 = vadd.f32 %v488, %v489
  %v491 = vrot.slane %v490, 2
  %v492 = vadd.f32 %v490, %v491
  %v493 = vrot.slane %v492, 1
  %v494 = vadd.f32 %v492, %v493
  %v495 = vsel %vm100, %v449, 0.0
  %v496 = vrot.slane %v495, 4
  %v497 = vadd.f32 %v495, %v496
  %v498 = vrot.slane %v497, 2
  %v499 = vadd.f32 %v497, %v498
  %v500 = vrot.slane %v499, 1
  %v501 = vadd.f32 %v499, %v500
  %v502 = vsel %vm100, %v450, 0.0
  %v503 = vrot.slane %v502, 4
  %v504 = vadd.f32 %v502, %v503
  %v505 = vrot.slane %v504, 2
  %v506 = vadd.f32 %v504, %v505
  %v507 = vrot.slane %v506, 1
  %v508 = vadd.f32 %v506, %v507
  %v509 = vsel %vm100, %v451, 0.0
  %v510 = vrot.slane %v509, 4
  %v511 = vadd.f32 %v509, %v510
  %v512 = vrot.slane %v511, 2
  %v513 = vadd.f32 %v511, %v512
  %v514 = vrot.slane %v513, 1
  %v515 = vadd.f32 %v513, %v514
  %v516 = vsel %vm100, %v452, 0.0
  %v517 = vrot.slane %v516, 4
  %v518 = vadd.f32 %v516, %v517
  %v519 = vrot.slane %v518, 2
  %v520 = vadd.f32 %v518, %v519
  %v521 = vrot.slane %v520, 1
  %v522 = vadd.f32 %v520, %v521
  %v523 = vsel %vm100, %v453, 0.0
  %v524 = vrot.slane %v523, 4
  %v525 = vadd.f32 %v523, %v524
  %v526 = vrot.slane %v525, 2
  %v527 = vadd.f32 %v525, %v526
  %v528 = vrot.slane %v527, 1
  %v529 = vadd.f32 %v527, %v528
  %v530 = vsel %vm100, %v454, 0.0
  %v531 = vrot.slane %v530, 4
  %v532 = vadd.f32 %v530, %v531
  %v533 = vrot.slane %v532, 2
  %v534 = vadd.f32 %v532, %v533
  %v535 = vrot.slane %v534, 1
  %v536 = vadd.f32 %v534, %v535
  %v537 = vsel %vm100, %v455, 0.0
  %v538 = vrot.slane %v537, 4
  %v539 = vadd.f32 %v537, %v538
  %v540 = vrot.slane %v539, 2
  %v541 = vadd.f32 %v539, %v540
  %v542 = vrot.slane %v541, 1
  %v543 = vadd.f32 %v541, %v542
  %v544 = vsel %vm100, %v456, 0.0
  %v545 = vrot.slane %v544, 4
  %v546 = vadd.f32 %v544, %v545
  %v547 = vrot.slane %v546, 2
  %v548 = vadd.f32 %v546, %v547
  %v549 = vrot.slane %v548, 1
  %v550 = vadd.f32 %v548, %v549
  %v551 = vsel %vm100, %v457, 0.0
  %v552 = vrot.slane %v551, 4
  %v553 = vadd.f32 %v551, %v552
  %v554 = vrot.slane %v553, 2
  %v555 = vadd.f32 %v553, %v554
  %v556 = vrot.slane %v555, 1
  %v557 = vadd.f32 %v555, %v556
  %v558 = vsel %vm100, %v458, 0.0
  %v559 = vrot.slane %v558, 4
  %v560 = vadd.f32 %v558, %v559
  %v561 = vrot.slane %v560, 2
  %v562 = vadd.f32 %v560, %v561
  %v563 = vrot.slane %v562, 1
  %v564 = vadd.f32 %v562, %v563
  %v565 = vsel %vm100, %v459, 0.0
  %v566 = vrot.slane %v565, 4
  %v567 = vadd.f32 %v565, %v566
  %v568 = vrot.slane %v567, 2
  %v569 = vadd.f32 %v567, %v568
  %v570 = vrot.slane %v569, 1
  %v571 = vadd.f32 %v569, %v570
  %v572 = vld [vmem:[%s8] sm:$0xff]
  %v573 = vld [vmem:[%s8 + $0x8] sm:$0xff]
  %v574 = vld [vmem:[%s8 + $0x10] sm:$0xff]
  %v575 = vld [vmem:[%s8 + $0x18] sm:$0xff]
  %v576 = vld [vmem:[%s8 + $0x20] sm:$0xff]
  %v577 = vld [vmem:[%s8 + $0x28] sm:$0xff]
  %vm594 = vcmask 1041409
  %v595 = vsel %vm594, %v473, %v466
  %vm596 = vcmask 1042434
  %v597 = vsel %vm596, %v480, %v595
  %vm598 = vcmask 1043459
  %v599 = vsel %vm598, %v487, %v597
  %vm600 = vcmask 1044484
  %v601 = vsel %vm600, %v494, %v599
  %vm602 = vcmask 1045509
  %v603 = vsel %vm602, %v501, %v601
  %vm604 = vcmask 1046534
  %v605 = vsel %vm604, %v508, %v603
  %vm606 = vcmask 1047559
  %v607 = vsel %vm606, %v515, %v605
  %v608 = vsel %vm594, %v529, %v522
  %v609 = vsel %vm596, %v536, %v608
  %v610 = vsel %vm598, %v543, %v609
  %v611 = vsel %vm600, %v550, %v610
  %v612 = vsel %vm602, %v557, %v611
  %v613 = vsel %vm604, %v564, %v612
  %v614 = vsel %vm606, %v571, %v613
  %v615 = vsel %vm100, %v607, 0
  %v617 = vsel %vm100, %v614, 0
  %619 = vmatpush.msra.mxu0 0.0
  %620 = vmatpush.msra.mxu0 0.0
  %621 = vmatpush.msra.mxu0 0.0
  %622 = vmatpush.msra.mxu0 0.0
  %623 = vmatpush.msra.mxu0 0.0
  %624 = vmatpush.msra.mxu0 0.0
  %625 = vmatpush.msra.mxu0 0.0
  %626 = vmatpush.msra.mxu0 0.0
  %627 = vmatpush.msra.mxu0 0.0
  %628 = vmatpush.msra.mxu0 0.0
  %629 = vmatpush.msra.mxu0 0.0
  %630 = vmatpush.msra.mxu0 0.0
  %631 = vmatpush.msra.mxu0 0.0
  %632 = vmatpush.msra.mxu0 0.0
  %633 = vmatpush.msra.mxu0 %v575
  %634 = vmatpush.msra.mxu0 %v572
  %635 = vmatmul.f32.gmra.mxu0 %v615
  %v636 = vpop.f32.mrf.mxu0
  %v637 = vadd.f32 0.0, %v636
  %638 = vmatmul.f32.gmra.mxu0 %v617
  %v639 = vpop.f32.mrf.mxu0
  %v640 = vadd.f32 0.0, %v639
  %641 = vdwg.mxu0
  %642 = vmatpush.msra.mxu0 0.0
  %643 = vmatpush.msra.mxu0 0.0
  %644 = vmatpush.msra.mxu0 0.0
  %645 = vmatpush.msra.mxu0 0.0
  %646 = vmatpush.msra.mxu0 0.0
  %647 = vmatpush.msra.mxu0 0.0
  %648 = vmatpush.msra.mxu0 0.0
  %649 = vmatpush.msra.mxu0 0.0
  %650 = vmatpush.msra.mxu0 0.0
  %651 = vmatpush.msra.mxu0 0.0
  %652 = vmatpush.msra.mxu0 0.0
  %653 = vmatpush.msra.mxu0 0.0
  %654 = vmatpush.msra.mxu0 0.0
  %655 = vmatpush.msra.mxu0 0.0
  %656 = vmatpush.msra.mxu0 %v576
  %657 = vmatpush.msra.mxu0 %v573
  %658 = vmatmul.f32.gmra.mxu0 %v615
  %v659 = vpop.f32.mrf.mxu0
  %v660 = vadd.f32 0.0, %v659
  %661 = vmatmul.f32.gmra.mxu0 %v617
  %v662 = vpop.f32.mrf.mxu0
  %v663 = vadd.f32 0.0, %v662
  %664 = vdwg.mxu0
  %665 = vmatpush.msra.mxu0 0.0
  %666 = vmatpush.msra.mxu0 0.0
  %667 = vmatpush.msra.mxu0 0.0
  %668 = vmatpush.msra.mxu0 0.0
  %669 = vmatpush.msra.mxu0 0.0
  %670 = vmatpush.msra.mxu0 0.0
  %671 = vmatpush.msra.mxu0 0.0
  %672 = vmatpush.msra.mxu0 0.0
  %673 = vmatpush.msra.mxu0 0.0
  %674 = vmatpush.msra.mxu0 0.0
  %675 = vmatpush.msra.mxu0 0.0
  %676 = vmatpush.msra.mxu0 0.0
  %677 = vmatpush.msra.mxu0 0.0
  %678 = vmatpush.msra.mxu0 0.0
  %679 = vmatpush.msra.mxu0 %v577
  %680 = vmatpush.msra.mxu0 %v574
  %681 = vmatmul.f32.gmra.mxu0 %v615
  %v682 = vpop.f32.mrf.mxu0
  %v683 = vadd.f32 0.0, %v682
  %684 = vmatmul.f32.gmra.mxu0 %v617
  %v685 = vpop.f32.mrf.mxu0
  %v686 = vadd.f32 0.0, %v685
  %687 = vdwg.mxu0
  %v688 = vld [vmem:[%s9] sm:$0xff]
  %v689 = vld [vmem:[%s9 + $0x8] sm:$0xff]
  %v690 = vld [vmem:[%s9 + $0x10] sm:$0xff]
  %v691 = vld [vmem:[%s9 + $0x18] sm:$0xff]
  %v692 = vld [vmem:[%s9 + $0x20] sm:$0xff]
  %v693 = vld [vmem:[%s9 + $0x28] sm:$0xff]
  %v694 = vld [vmem:[%s9 + $0x30] sm:$0xff]
  %v695 = vld [vmem:[%s9 + $0x38] sm:$0xff]
  %v696 = vld [vmem:[%s9 + $0x40] sm:$0xff]
  %v697 = vld [vmem:[%s9 + $0x48] sm:$0xff]
  %v698 = vld [vmem:[%s9 + $0x50] sm:$0xff]
  %v699 = vld [vmem:[%s9 + $0x58] sm:$0xff]
  %v700 = vld [vmem:[%s9 + $0x60] sm:$0xff]
  %v701 = vld [vmem:[%s9 + $0x68] sm:$0xff]
  %v702 = vld [vmem:[%s9 + $0x70] sm:$0xff]
  %v703 = vld [vmem:[%s9 + $0x78] sm:$0xff]
  %v704 = vld [vmem:[%s9 + $0x80] sm:$0xff]
  %v705 = vld [vmem:[%s9 + $0x88] sm:$0xff]
  %v706 = vld [vmem:[%s9 + $0x90] sm:$0xff]
  %v707 = vld [vmem:[%s9 + $0x98] sm:$0xff]
  %v708 = vld [vmem:[%s9 + $0xa0] sm:$0xff]
  %v709 = vld [vmem:[%s9 + $0xa8] sm:$0xff]
  %v710 = vld [vmem:[%s9 + $0xb0] sm:$0xff]
  %v711 = vld [vmem:[%s9 + $0xb8] sm:$0xff]
  %v712 = vld [vmem:[%s9 + $0xc0] sm:$0xff]
  %v713 = vld [vmem:[%s9 + $0xc8] sm:$0xff]
  %v714 = vld [vmem:[%s9 + $0xd0] sm:$0xff]
  %v715 = vld [vmem:[%s9 + $0xd8] sm:$0xff]
  %v716 = vld [vmem:[%s9 + $0xe0] sm:$0xff]
  %v717 = vld [vmem:[%s9 + $0xe8] sm:$0xff]
  %v718 = vld [vmem:[%s9 + $0xf0] sm:$0xff]
  %v719 = vld [vmem:[%s9 + $0xf8] sm:$0xff]
  %v720 = vld [vmem:[%s9 + $0x100] sm:$0xff]
  %v721 = vld [vmem:[%s9 + $0x108] sm:$0xff]
  %v722 = vld [vmem:[%s9 + $0x110] sm:$0xff]
  %v723 = vld [vmem:[%s9 + $0x118] sm:$0xff]
  %v724 = vld [vmem:[%s9 + $0x120] sm:$0xff]
  %v725 = vld [vmem:[%s9 + $0x128] sm:$0xff]
  %v726 = vld [vmem:[%s9 + $0x130] sm:$0xff]
  %v727 = vld [vmem:[%s9 + $0x138] sm:$0xff]
  %v728 = vld [vmem:[%s9 + $0x140] sm:$0xff]
  %v729 = vld [vmem:[%s9 + $0x148] sm:$0xff]
  %v730 = vld [vmem:[%s9 + $0x150] sm:$0xff]
  %v731 = vld [vmem:[%s9 + $0x158] sm:$0xff]
  %v732 = vld [vmem:[%s9 + $0x160] sm:$0xff]
  %v733 = vld [vmem:[%s9 + $0x168] sm:$0xff]
  %v734 = vld [vmem:[%s9 + $0x170] sm:$0xff]
  %v735 = vld [vmem:[%s9 + $0x178] sm:$0xff]
  %736 = vmatpush.msra.mxu0 %v703
  %737 = vmatpush.msra.mxu0 %v702
  %738 = vmatpush.msra.mxu0 %v701
  %739 = vmatpush.msra.mxu0 %v700
  %740 = vmatpush.msra.mxu0 %v699
  %741 = vmatpush.msra.mxu0 %v698
  %742 = vmatpush.msra.mxu0 %v697
  %743 = vmatpush.msra.mxu0 %v696
  %744 = vmatpush.msra.mxu0 %v695
  %745 = vmatpush.msra.mxu0 %v694
  %746 = vmatpush.msra.mxu0 %v693
  %747 = vmatpush.msra.mxu0 %v692
  %748 = vmatpush.msra.mxu0 %v691
  %749 = vmatpush.msra.mxu0 %v690
  %750 = vmatpush.msra.mxu0 %v689
  %751 = vmatpush.msra.mxu0 %v688
  %752 = vmatmul.f32.gmra.mxu0 %v637
  %v753 = vpop.f32.mrf.mxu0
  %v754 = vadd.f32 0.0, %v753
  %755 = vmatmul.f32.gmra.mxu0 %v640
  %v756 = vpop.f32.mrf.mxu0
  %v757 = vadd.f32 0.0, %v756
  %758 = vdwg.mxu0
  %759 = vmatpush.msra.mxu0 %v719
  %760 = vmatpush.msra.mxu0 %v718
  %761 = vmatpush.msra.mxu0 %v717
  %762 = vmatpush.msra.mxu0 %v716
  %763 = vmatpush.msra.mxu0 %v715
  %764 = vmatpush.msra.mxu0 %v714
  %765 = vmatpush.msra.mxu0 %v713
  %766 = vmatpush.msra.mxu0 %v712
  %767 = vmatpush.msra.mxu0 %v711
  %768 = vmatpush.msra.mxu0 %v710
  %769 = vmatpush.msra.mxu0 %v709
  %770 = vmatpush.msra.mxu0 %v708
  %771 = vmatpush.msra.mxu0 %v707
  %772 = vmatpush.msra.mxu0 %v706
  %773 = vmatpush.msra.mxu0 %v705
  %774 = vmatpush.msra.mxu0 %v704
  %775 = vmatmul.f32.gmra.mxu0 %v660
  %v776 = vpop.f32.mrf.mxu0
  %v777 = vadd.f32 %v754, %v776
  %778 = vmatmul.f32.gmra.mxu0 %v663
  %v779 = vpop.f32.mrf.mxu0
  %v780 = vadd.f32 %v757, %v779
  %781 = vdwg.mxu0
  %782 = vmatpush.msra.mxu0 %v735
  %783 = vmatpush.msra.mxu0 %v734
  %784 = vmatpush.msra.mxu0 %v733
  %785 = vmatpush.msra.mxu0 %v732
  %786 = vmatpush.msra.mxu0 %v731
  %787 = vmatpush.msra.mxu0 %v730
  %788 = vmatpush.msra.mxu0 %v729
  %789 = vmatpush.msra.mxu0 %v728
  %790 = vmatpush.msra.mxu0 %v727
  %791 = vmatpush.msra.mxu0 %v726
  %792 = vmatpush.msra.mxu0 %v725
  %793 = vmatpush.msra.mxu0 %v724
  %794 = vmatpush.msra.mxu0 %v723
  %795 = vmatpush.msra.mxu0 %v722
  %796 = vmatpush.msra.mxu0 %v721
  %797 = vmatpush.msra.mxu0 %v720
  %798 = vmatmul.f32.gmra.mxu0 %v683
  %v799 = vpop.f32.mrf.mxu0
  %v800 = vadd.f32 %v777, %v799
  %801 = vmatmul.f32.gmra.mxu0 %v686
  %v802 = vpop.f32.mrf.mxu0
  %v803 = vadd.f32 %v780, %v802
  %804 = vdwg.mxu0
  %v805 = vld [vmem:[%s10] sm:$0x1]
  %v807 = vperm.slane %v805, 0
  %v809 = vadd.f32 %v800, %v807
  %v810 = vld [vmem:[%s11] sm:$0x1]
  %v812 = vperm.slane %v810, 0
  %813 = vrot.lane.b32.xlu0 %v812, 32
  %v814 = vpop.permute.xlu0 %813
  %v816 = vadd.f32 %v803, %v814
  %818 = vrot.lane.b32.xlu0 %v816, 96
  %v819 = vpop.permute.xlu0 %818
  %v821 = vxor.u32 %v293, 2147483648
  %v822 = vxor.u32 %v296, 2147483648
  %v823 = vmul.f32 %v821, 1.442695
  %v824 = vpow.pop %v823
  %v825 = vmul.f32 %v822, 1.442695
  %v826 = vpow.pop %v825
  %v827 = vadd.f32 %v824, 1.0
  %v828 = vadd.f32 %v826, 1.0
  %v829 = vrcp.pop %v827
  %v830 = vmul.f32 %v827, %v829
  %v831 = vsub.f32 1.0, %v830
  %v832 = vmul.f32 %v829, %v831
  %v833 = vadd.f32 %v829, %v832
  %vm834 = vweird.f32 %v827
  %vm835 = vweird.f32 %v829
  %vm836 = vmor %vm834, %vm835
  %v837 = vsel %vm836, %v829, %v833
  %v838 = vand.u32 2147483647, %v827
  %vm839 = vcmp.eq.f32.partialorder %v838, 8.507059e+37
  %v840 = vand.u32 %v827, 2147483648
  %v841 = vor.u32 1.1754944e-38, %v840
  %v842 = vsel %vm839, %v841, %v837
  %v843 = vmul.f32 1.0, %v842
  %v844 = vrcp.pop %v828
  %v845 = vmul.f32 %v828, %v844
  %v846 = vsub.f32 1.0, %v845
  %v847 = vmul.f32 %v844, %v846
  %v848 = vadd.f32 %v844, %v847
  %vm849 = vweird.f32 %v828
  %vm850 = vweird.f32 %v844
  %vm851 = vmor %vm849, %vm850
  %v852 = vsel %vm851, %v844, %v848
  %v853 = vand.u32 2147483647, %v828
  %vm854 = vcmp.eq.f32.partialorder %v853, 8.507059e+37
  %v855 = vand.u32 %v828, 2147483648
  %v856 = vor.u32 1.1754944e-38, %v855
  %v857 = vsel %vm854, %v856, %v852
  %v858 = vmul.f32 1.0, %v857
  %v859 = vmul.f32 %v293, %v843
  %v860 = vmul.f32 %v296, %v858
  %v861 = vld [vmem:[%s12] sm:$0xff]
  %v862 = vld [vmem:[%s12 + $0x8] sm:$0xff]
  %v863 = vld [vmem:[%s12 + $0x10] sm:$0xff]
  %v864 = vld [vmem:[%s12 + $0x18] sm:$0xff]
  %v866 = vsel %vm64, %v859, 0
  %v869 = vsel %vm64, %v860, 0
  %871 = vmatpush.msra.mxu0 0.0
  %872 = vmatpush.msra.mxu0 0.0
  %873 = vmatpush.msra.mxu0 0.0
  %874 = vmatpush.msra.mxu0 0.0
  %875 = vmatpush.msra.mxu0 0.0
  %876 = vmatpush.msra.mxu0 0.0
  %877 = vmatpush.msra.mxu0 0.0
  %878 = vmatpush.msra.mxu0 0.0
  %879 = vmatpush.msra.mxu0 0.0
  %880 = vmatpush.msra.mxu0 0.0
  %881 = vmatpush.msra.mxu0 0.0
  %882 = vmatpush.msra.mxu0 0.0
  %883 = vmatpush.msra.mxu0 %v864
  %884 = vmatpush.msra.mxu0 %v863
  %885 = vmatpush.msra.mxu0 %v862
  %886 = vmatpush.msra.mxu0 %v861
  %887 = vmatmul.f32.gmra.mxu0 %v866
  %v888 = vpop.f32.mrf.mxu0
  %v889 = vadd.f32 0.0, %v888
  %890 = vmatmul.f32.gmra.mxu0 %v869
  %v891 = vpop.f32.mrf.mxu0
  %v892 = vadd.f32 0.0, %v891
  %893 = vdwg.mxu0
  %v894 = vxor.u32 %v809, 2147483648
  %v895 = vxor.u32 %v819, 2147483648
  %v896 = vmul.f32 %v894, 1.442695
  %v897 = vpow.pop %v896
  %v898 = vmul.f32 %v895, 1.442695
  %v899 = vpow.pop %v898
  %v900 = vadd.f32 %v897, 1.0
  %v901 = vadd.f32 %v899, 1.0
  %v902 = vrcp.pop %v900
  %v903 = vmul.f32 %v900, %v902
  %v904 = vsub.f32 1.0, %v903
  %v905 = vmul.f32 %v902, %v904
  %v906 = vadd.f32 %v902, %v905
  %vm907 = vweird.f32 %v900
  %vm908 = vweird.f32 %v902
  %vm909 = vmor %vm907, %vm908
  %v910 = vsel %vm909, %v902, %v906
  %v911 = vand.u32 2147483647, %v900
  %vm912 = vcmp.eq.f32.partialorder %v911, 8.507059e+37
  %v913 = vand.u32 %v900, 2147483648
  %v914 = vor.u32 1.1754944e-38, %v913
  %v915 = vsel %vm912, %v914, %v910
  %v916 = vmul.f32 1.0, %v915
  %v917 = vrcp.pop %v901
  %v918 = vmul.f32 %v901, %v917
  %v919 = vsub.f32 1.0, %v918
  %v920 = vmul.f32 %v917, %v919
  %v921 = vadd.f32 %v917, %v920
  %vm922 = vweird.f32 %v901
  %vm923 = vweird.f32 %v917
  %vm924 = vmor %vm922, %vm923
  %v925 = vsel %vm924, %v917, %v921
  %v926 = vand.u32 2147483647, %v901
  %vm927 = vcmp.eq.f32.partialorder %v926, 8.507059e+37
  %v928 = vand.u32 %v901, 2147483648
  %v929 = vor.u32 1.1754944e-38, %v928
  %v930 = vsel %vm927, %v929, %v925
  %v931 = vmul.f32 1.0, %v930
  %v932 = vmul.f32 %v809, %v916
  %v933 = vmul.f32 %v819, %v931
  %v934 = vld [vmem:[%s13] sm:$0xff]
  %v935 = vld [vmem:[%s13 + $0x8] sm:$0xff]
  %v936 = vld [vmem:[%s13 + $0x10] sm:$0xff]
  %v937 = vld [vmem:[%s13 + $0x18] sm:$0xff]
  %v939 = vsel %vm64, %v932, 0
  %v942 = vsel %vm64, %v933, 0
  %944 = vmatpush.msra.mxu0 0.0
  %945 = vmatpush.msra.mxu0 0.0
  %946 = vmatpush.msra.mxu0 0.0
  %947 = vmatpush.msra.mxu0 0.0
  %948 = vmatpush.msra.mxu0 0.0
  %949 = vmatpush.msra.mxu0 0.0
  %950 = vmatpush.msra.mxu0 0.0
  %951 = vmatpush.msra.mxu0 0.0
  %952 = vmatpush.msra.mxu0 0.0
  %953 = vmatpush.msra.mxu0 0.0
  %954 = vmatpush.msra.mxu0 0.0
  %955 = vmatpush.msra.mxu0 0.0
  %956 = vmatpush.msra.mxu0 %v937
  %957 = vmatpush.msra.mxu0 %v936
  %958 = vmatpush.msra.mxu0 %v935
  %959 = vmatpush.msra.mxu0 %v934
  %960 = vmatmul.f32.gmra.mxu0 %v939
  %v961 = vpop.f32.mrf.mxu0
  %v962 = vadd.f32 0.0, %v961
  %963 = vmatmul.f32.gmra.mxu0 %v942
  %v964 = vpop.f32.mrf.mxu0
  %v965 = vadd.f32 0.0, %v964
  %966 = vdwg.mxu0
  %v967 = vld [vmem:[%s14] sm:$0x1]
  %v969 = vperm.slane %v967, 0
  %v971 = vadd.f32 %v969, %v889
  %973 = vrot.lane.b32.xlu0 %v892, 64
  %v974 = vpop.permute.xlu0 %973
  %v976 = vadd.f32 %v971, %v974
  %v977 = vadd.f32 %v976, %v962
  %979 = vrot.lane.b32.xlu0 %v965, 64
  %v980 = vpop.permute.xlu0 %979
  %v982 = vadd.f32 %v977, %v980
  %v983 = vxor.u32 %v982, 2147483648
  %v984 = vmul.f32 %v983, 1.442695
  %v985 = vpow.pop %v984
  %v986 = vadd.f32 %v985, 1.0
  %v987 = vrcp.pop %v986
  %v988 = vmul.f32 %v986, %v987
  %v989 = vsub.f32 1.0, %v988
  %v990 = vmul.f32 %v987, %v989
  %v991 = vadd.f32 %v987, %v990
  %vm992 = vweird.f32 %v986
  %vm993 = vweird.f32 %v987
  %vm994 = vmor %vm992, %vm993
  %v995 = vsel %vm994, %v987, %v991
  %v996 = vand.u32 2147483647, %v986
  %vm997 = vcmp.eq.f32.partialorder %v996, 8.507059e+37
  %v998 = vand.u32 %v986, 2147483648
  %v999 = vor.u32 1.1754944e-38, %v998
  %v1000 = vsel %vm997, %v999, %v995
  %v1001 = vmul.f32 1.0, %v1000
  %v1002 = vmul.f32 %v982, %v1001
  %v1003 = vld [vmem:[%s15] sm:$0x1]
  %v1005 = vperm.slane %v1003, 0
  %v1007 = vmul.f32 %v1002, %v1005
  %vm1008 = vcmask 523264
  %v1009 = vsel %vm1008, %v1007, 0.0
  %1010 = vadd.xlane.f32.xlu0 %v1009
  %v1011 = vpop.xlane.xlu0 %1010
  %v1012 = vld [vmem:[#allocation2] sm:$0x1]
  %v1014 = vperm.slane %v1012, 0
  %v1016 = vadd.f32 %v1011, %v1014
  %vm1017 = vcmask 7168
  %1018 = vst.msk [vmem:[%s17] sm:$0xff] %vm1017, %v1016
  // Predicated region
  $region70: #{het_rpi_forward.1} parent=0 // pred_check
    _
  $region71: #{het_rpi_forward.1} parent=0 // pred_check_branch
    %1020 = sbr.rel (0) target = $region73
  $region72: #{het_rpi_forward.1} parent=0 // pred_region
    _
  $region73: #{het_rpi_forward.1} parent=0 // pred_fallthru
    _
  // Predicated region
  $region74: #{het_rpi_forward.1} parent=0 // pred_check
    _
  $region75: #{het_rpi_forward.1} parent=0 // pred_check_branch
    %1022 = sbr.rel (0) target = $region77
  $region76: #{het_rpi_forward.1} parent=0 // pred_region
    _
  $region77: #{het_rpi_forward.1} parent=0 // pred_fallthru
    _

</llo_original>
